<compile_context>
chip_gen: v7x
topology: tpu7x:2x2x1
jax: 0.10.0
libtpu: 0.0.40
codegen_flags: <defaults>
</compile_context>

<pallas_src>
import functools

import jax
import jax.numpy as jnp
from jax.experimental import pallas as pl
from jax.experimental.pallas import tpu as pltpu


def _round_up(x, m):
    return (x + m - 1) // m * m


def _scale_predictor_kernel(feat_ref, w_ref, b_ref, out_ref, *, g, nz):
    # feat_ref: (tb, g*nz) VMEM    w_ref: (1, g*nz) VMEM f32
    # b_ref:    (1,)       SMEM f32 (holds bias + 1)
    # out_ref:  (1, g, tb) VMEM f32 (batch tile on the lane axis)
    #
    # TODO(synk): on v6e/v7x with bf16 feat the multiply could stay in bf16
    # (f32 accumulate only); kept fully in f32 so the same kernel is exact on
    # v5e (no bf16 VPU).
    x = feat_ref[...].astype(jnp.float32)      # cast in-kernel
    prod = x * w_ref[...]                      # (tb, g*nz) VPU multiply
    b = b_ref[0]                               # scalar: bias + 1
    rows = []
    for j in range(g):                         # g is a small static constant
        s = jnp.sum(prod[:, j * nz:(j + 1) * nz], axis=-1)   # lane reduce -> (tb,)
        rows.append(jnp.maximum(s + b, 0.0) + 1e-12)         # relu(linear + 1) + eps
    block = jnp.stack(rows, axis=0)            # (g, tb); tiny sublane->lane relayout,
    out_ref[...] = block[None, :, :].astype(out_ref.dtype)   # hidden under the feat DMA


def scale_predictor(feat, weight, bias):
    """feat: (B, nz); weight: (1, nz) (PyTorch Linear layout); bias: (1,) -> (B, 1) f32."""
    B, nz = feat.shape

    # --- lane packing: pack g consecutive batch rows into one 128-wide row ---
    g = 1
    if 0 < nz < 128 and 128 % nz == 0:
        cand = 128 // nz                       # power of two
        while cand > 1 and (B % cand != 0 or B // cand < 8):
            cand //= 2
        g = cand
    rows = B // g
    width = g * nz
    feat_p = feat.reshape(rows, width) if g > 1 else feat   # row-major -> cheap reshape

    # --- tile sizing: budget VMEM bytes, keep >= ~4 tiles, lane-align to 128 ---
    # 8 MiB per feat buffer (double-buffered -> 16 MiB) + tiny out/weight buffers
    # stays well within a 32 MiB scoped-VMEM limit, which is safe on v5e/v6e
    # (128 MiB physical) and v7x (64 MiB physical, 32 MiB default scoped).
    target_buffer_bytes = 8 * 1024 * 1024
    elem_bytes = feat.dtype.itemsize
    vmem_width = _round_up(width, 128)         # account for lane padding of the VMEM tile
    rows_by_bytes = max(
        128, ((target_buffer_bytes // (elem_bytes * vmem_width)) // 128) * 128)
    rows_by_count = _round_up(pl.cdiv(rows, 4), 128)   # >= ~4 tiles (>= 2x TCs on v7x)
    tb = min(rows_by_bytes, rows_by_count, _round_up(rows, 8))
    num_tiles = pl.cdiv(rows, tb)

    w = jnp.tile(weight.reshape(1, nz).astype(jnp.float32), (1, g))   # (1, g*nz), f32
    b = bias.reshape(1).astype(jnp.float32) + 1.0                     # fold "+ 1" into bias

    kernel = functools.partial(_scale_predictor_kernel, g=g, nz=nz)

    out = pl.pallas_call(
        kernel,
        out_shape=jax.ShapeDtypeStruct((num_tiles, g, tb), jnp.float32),
        grid_spec=pltpu.PrefetchScalarGridSpec(
            num_scalar_prefetch=0,
            grid=(num_tiles,),
            in_specs=[
                pl.BlockSpec((tb, width), lambda i: (i, 0)),           # feat tile (streamed)
                pl.BlockSpec((1, width), lambda i: (0, 0)),            # weight (resident)
                pl.BlockSpec(memory_space=pltpu.MemorySpace.SMEM),     # bias + 1 scalar
            ],
            out_specs=pl.BlockSpec((1, g, tb), lambda i: (i, 0, 0)),   # lane-dense output
        ),
        compiler_params=pltpu.CompilerParams(
            dimension_semantics=("parallel",),     # independent tiles; 2 TCs on v7x
            vmem_limit_bytes=32 * 1024 * 1024,
        ),
    )(feat_p, w, b)

    # (num_tiles, g, tb): element (i, j, t) is batch index (i*tb + t)*g + j.
    # Reassembly is a tiny (B*4-byte) XLA op; padded tail rows are sliced off.
    flat = jnp.transpose(out, (0, 2, 1)).reshape(-1)
    return flat[:B].reshape(B, 1)


def scale_predictor_ref(feat, weight, bias):
    s = feat.astype(jnp.float32) @ weight.astype(jnp.float32).T + bias + 1.0
    return jnp.maximum(s, 0.0) + 1e-12


if __name__ == "__main__":
    key = jax.random.PRNGKey(0)
    k_feat, k_w, k_b = jax.random.split(key, 3)

    # Small shapes consistent with nn.Linear(nz, 1).
    B, nz = 8, 32
    feat = jax.random.normal(k_feat, (B, nz), dtype=jnp.float32)
    weight = jax.random.normal(k_w, (1, nz), dtype=jnp.float32) * 0.1   # (1, nz)
    bias = jax.random.normal(k_b, (1,), dtype=jnp.float32) * 0.1        # (1,)

    out = jax.block_until_ready(scale_predictor(feat, weight, bias))
    ref = scale_predictor_ref(feat, weight, bias)
    assert out.shape == (B, 1)
    assert jnp.allclose(out, ref, atol=1e-5, rtol=1e-5)

    # Lane-packed (g=4) path with a partial last tile.
    B2 = 2500
    feat2 = jax.random.normal(k_feat, (B2, nz), dtype=jnp.float32)
    out2 = jax.block_until_ready(scale_predictor(feat2, weight, bias))
    ref2 = scale_predictor_ref(feat2, weight, bias)
    assert out2.shape == (B2, 1)
    assert jnp.allclose(out2, ref2, atol=1e-5, rtol=1e-5)

    # Partial packing fallback (B not divisible by 4 -> g=2).
    B3 = 1234
    feat3 = jax.random.normal(k_feat, (B3, nz), dtype=jnp.float32)
    out3 = jax.block_until_ready(scale_predictor(feat3, weight, bias))
    ref3 = scale_predictor_ref(feat3, weight, bias)
    assert out3.shape == (B3, 1)
    assert jnp.allclose(out3, ref3, atol=1e-5, rtol=1e-5)

    print("KERNEL_OK")
</pallas_src>

<mosaic_0001>
module attributes {stable_mosaic.version = 11 : i64} {
  func.func @_scale_predictor_kernel(%arg0: i32, %arg1: memref<8x32xf32, #tpu.memory_space<vmem>>, %arg2: memref<1x32xf32, #tpu.memory_space<vmem>>, %arg3: memref<1xf32, #tpu.memory_space<smem>>, %arg4: memref<1x1x8xf32, #tpu.memory_space<vmem>>) attributes {dimension_semantics = [#tpu.dimension_semantics<parallel>], iteration_bounds = array<i64: 1>, scalar_prefetch = 0 : i64, scratch_operands = 0 : i64, tpu.core_type = #tpu.core_type<tc>, window_params = [{transform_indices = @transform_0, window_bounds = array<i64: 8, 32>}, {pipeline_mode = #tpu.pipeline_mode<synchronous>, transform_indices = @transform_1, window_bounds = array<i64: 1, 32>}, {transform_indices = @transform_2, window_bounds = array<i64: 1>}, {transform_indices = @transform_3, window_bounds = array<i64: 1, 1, 8>}]} {
    %c0 = arith.constant 0 : index
    %c0_0 = arith.constant 0 : index
    %0 = vector.load %arg1[%c0, %c0_0] : memref<8x32xf32, #tpu.memory_space<vmem>>, vector<8x32xf32>
    %c0_1 = arith.constant 0 : index
    %c0_2 = arith.constant 0 : index
    %1 = vector.load %arg2[%c0_1, %c0_2] : memref<1x32xf32, #tpu.memory_space<vmem>>, vector<1x32xf32>
    %2 = vector.broadcast %1 : vector<1x32xf32> to vector<8x32xf32>
    %3 = arith.mulf %0, %2 : vector<8x32xf32>
    %c0_3 = arith.constant 0 : index
    %4 = memref.load %arg3[%c0_3] : memref<1xf32, #tpu.memory_space<smem>>
    %cst = arith.constant dense<0.000000e+00> : vector<8xf32>
    %5 = vector.multi_reduction <add>, %3, %cst [1] : vector<8x32xf32> to vector<8xf32>
    %6 = vector.broadcast %4 : f32 to vector<8xf32>
    %7 = arith.addf %5, %6 : vector<8xf32>
    %cst_4 = arith.constant 0.000000e+00 : f32
    %8 = vector.broadcast %cst_4 : f32 to vector<8xf32>
    %9 = arith.maximumf %7, %8 : vector<8xf32>
    %cst_5 = arith.constant 9.99999996E-13 : f32
    %10 = vector.broadcast %cst_5 : f32 to vector<8xf32>
    %11 = arith.addf %9, %10 : vector<8xf32>
    %12 = vector.shape_cast %11 : vector<8xf32> to vector<1x8xf32>
    %13 = vector.shape_cast %12 : vector<1x8xf32> to vector<1x1x8xf32>
    %c0_6 = arith.constant 0 : index
    %c0_7 = arith.constant 0 : index
    %c0_8 = arith.constant 0 : index
    %14 = vector.load %arg4[%c0_6, %c0_7, %c0_8] : memref<1x1x8xf32, #tpu.memory_space<vmem>>, vector<1x1x8xf32>
    tpu.vector_store %arg4[%c0_6, %c0_7, %c0_8], %13 {strides = array<i32>} : memref<1x1x8xf32, #tpu.memory_space<vmem>>, vector<1x1x8xf32>,
    return
  }
  func.func @transform_0(%arg0: i32) -> (i32, i32) {
    %c0_i32 = arith.constant 0 : i32
    %c0_i32_0 = arith.constant 0 : i32
    return %arg0, %c0_i32 : i32, i32
  }
  func.func @transform_1(%arg0: i32) -> (i32, i32) {
    %c0_i32 = arith.constant 0 : i32
    %c0_i32_0 = arith.constant 0 : i32
    %c0_i32_1 = arith.constant 0 : i32
    return %c0_i32, %c0_i32_0 : i32, i32
  }
  func.func @transform_2(%arg0: i32) -> i32 {
    %c0_i32 = arith.constant 0 : i32
    %c0_i32_0 = arith.constant 0 : i32
    return %c0_i32 : i32
  }
  func.func @transform_3(%arg0: i32) -> (i32, i32, i32) {
    %c0_i32 = arith.constant 0 : i32
    %c0_i32_0 = arith.constant 0 : i32
    %c0_i32_1 = arith.constant 0 : i32
    return %arg0, %c0_i32, %c0_i32_0 : i32, i32, i32
  }
}

</mosaic_0001>

<llo_original>
// kernel: tpu_custom_call.1
$region0: #{tpu_custom_call.1}
  #allocation0 [shape = 'u32[]', space=smem, size = 0x4, offset = 0x4, fixed_abs, tag = 'smem constant byte address 0x4 - core index']
  #allocation1 [shape = 'u32[144,128]{1,0:T(1,128)}', space=vmem, size = 0x12000, scoped, tag = 'internal scratch']
  #allocation2 [shape = 'f32[1]{0:T(128)S(6)}', space=smem, size = 0x200, scoped, tag = 'scoped memory for tpu_custom_call.1']
  %s0 = inlined_call_operand.hbm [shape: f32[8,32], index: 0, kind: input, shape index: {}]
  %s1 = inlined_call_operand.vmem [shape: f32[1,32], index: 1, kind: input, shape index: {}]
  %s2 = inlined_call_operand.<no memory space> [shape: f32[1], index: 2, kind: input, shape index: {}]
  %s3 = inlined_call_operand.hbm [shape: f32[1,1,8], index: 3, kind: output, shape index: {}]
  %s4 = sld [smem:[#allocation0]]
  $region26: #{tpu_custom_call.1} parent=0
    _
  %s6 = ssub.s32 1, %s4
  %s7 = scalar_select 0, %s6, %s4
  %8 = sst [smem:[#allocation2]] %s2
  $region1: #{tpu_custom_call.1} parent=0
    #allocation3 [shape = 'u8[4096]{0}', space=vmem, size = 0x1000, scoped, tag = 'input window, operand 0, single buffered']
    #allocation4 [shape = 's32[1]{0}', space=sflag, size = 0x4, scoped, tag = 'scoped memory for tpu_custom_call.1']
    #allocation5 [shape = 's32[1]{0}', space=sflag, size = 0x4, scoped, tag = 'scoped memory for tpu_custom_call.1']
    #allocation6 [shape = 'u8[512]{0}', space=vmem, size = 0x400, scoped, tag = 'output window, operand 0, single buffered']
    %9 = vsyncpa [#allocation4], 0
    %10 = vsyncpa [#allocation5], 0
    // Predicated region
    $region2: #{tpu_custom_call.1} parent=1 // pred_check
      _
    $region3: #{tpu_custom_call.1} parent=1 // pred_check_branch
      %12 = sbr.rel (0) target = $region5
    $region4: #{tpu_custom_call.1} parent=1 // pred_region
      %s14 = ssub.s32 128, 128
      %15 = vsyncadd [#allocation4], %s14
      %s17 = sshll.u32 [#allocation3], 4
      %s18 = int_to_ptr.vmem [resolvable:$true] %s17
      %20 = dma.hbm_to_vmem [thread:$0]  %s0, 128, %s18, [#allocation4]
    $region5: #{tpu_custom_call.1} parent=1 // pred_fallthru
      _
    // Predicated region
    $region6: #{tpu_custom_call.1} parent=1 // pred_check
      _
    $region7: #{tpu_custom_call.1} parent=1 // pred_check_branch
      %22 = sbr.rel (0) target = $region9
    $region8: #{tpu_custom_call.1} parent=1 // pred_region
      _
    $region9: #{tpu_custom_call.1} parent=1 // pred_fallthru
      _
    // Predicated region
    $region10: #{tpu_custom_call.1} parent=1 // pred_check
      _
    $region11: #{tpu_custom_call.1} parent=1 // pred_check_branch
      %24 = sbr.rel (0) target = $region13
    $region12: #{tpu_custom_call.1} parent=1 // pred_region
      _
    $region13: #{tpu_custom_call.1} parent=1 // pred_fallthru
      _
    // Predicated region
    $region14: #{tpu_custom_call.1} parent=1 // pred_check
      _
    $region15: #{tpu_custom_call.1} parent=1 // pred_check_branch
      %26 = sbr.rel (0) target = $region17
    $region16: #{tpu_custom_call.1} parent=1 // pred_region
      %27 = dma.done [#allocation4], 128
    $region17: #{tpu_custom_call.1} parent=1 // pred_fallthru
      _
    %v28 = vld [vmem:[#allocation3] sm:$0xff]
    %v29 = vld [vmem:[%s1] sm:$0x1]
    %v31 = vlaneseq
    %v32 = vshrl.u32 %v31, 7
    %v33 = vsub.s32 0, %v32
    %v34 = vrot.slane %v29, %v33
    %v36 = vmul.f32 %v28, %v34
    %s37 = sld [smem:[#allocation2]]
    %vm38 = vcmask 261120
    %v39 = vsel %vm38, %v36, 0.0
    %40 = vadd.xlane.f32.xlu0 %v39
    %v41 = vpop.xlane.xlu0 %40
    %v42 = vstv %s37
    %v43 = vadd.f32 %v41, %v42
    %v44 = vmax.f32 %v43, 0.0
    %v45 = vadd.f32 %v44, 1e-12
    %v47 = vlaneseq
    %v48 = vand.u32 %v47, 127
    %v49 = vlaneseq
    %v50 = vshrl.u32 %v49, 7
    %v51 = vsub.s32 %v48, %v50
    %v52 = vrot.slane %v45, %v51
    %vm54 = vcmask 57344
    %55 = vst.msk [vmem:[#allocation6] sm:$0x1] %vm54, %v52
    // Predicated region
    $region18: #{tpu_custom_call.1} parent=1 // pred_check
      _
    $region19: #{tpu_custom_call.1} parent=1 // pred_check_branch
      %57 = sbr.rel (0) target = $region21
    $region20: #{tpu_custom_call.1} parent=1 // pred_region
      %s59 = ssub.s32 16, 16
      %60 = vsyncadd [#allocation5], %s59
      %s62 = sshll.u32 [#allocation6], 4
      %s63 = int_to_ptr.vmem [resolvable:$true] %s62
      %65 = dma.vmem_to_hbm [thread:$0]  %s63, 16, %s3, [#allocation5]
    $region21: #{tpu_custom_call.1} parent=1 // pred_fallthru
      _
    // Predicated region
    $region22: #{tpu_custom_call.1} parent=1 // pred_check
      _
    $region23: #{tpu_custom_call.1} parent=1 // pred_check_branch
      %67 = sbr.rel (0) target = $region25
    $region24: #{tpu_custom_call.1} parent=1 // pred_region
      %68 = dma.done [#allocation5], 16
    $region25: #{tpu_custom_call.1} parent=1 // pred_fallthru
      _
    %69 = vsyncpa [#allocation4], 1
    %70 = vsyncpa [#allocation5], 1

</llo_original>
